<compile_context>
chip_gen: v5e
topology: v5e:2x2
jax: 0.10.0
libtpu: 0.0.40
codegen_flags: <defaults>
</compile_context>

<pallas_src>
import jax
import jax.numpy as jnp
from jax.experimental import pallas as pl
from jax.experimental.pallas import tpu as pltpu


def _activation_chain_kernel(x_ref, o_ref):
    # relu6 -> +3 -> leaky_relu(0.1) -> hardtanh(0,6) -> relu  ==  clip(x,0,3)+3
    x = x_ref[...]
    o_ref[...] = jnp.minimum(jnp.maximum(x, 0.0), 3.0) + 3.0


def _round_up(v, m):
    return ((v + m - 1) // m) * m


def _sublane_for(dtype):
    # Sub-32-bit dtypes pack along sublanes: f32 -> 8, bf16 -> 16, int8/fp8 -> 32.
    return {4: 8, 2: 16, 1: 32}.get(jnp.dtype(dtype).itemsize, 8)


def _run_kernel_2d(x2d):
    """Run the elementwise kernel on a lane-dense (rows, W) slab, W % 128 == 0."""
    rows, w = x2d.shape
    dtype = x2d.dtype
    itemsize = jnp.dtype(dtype).itemsize
    sublane = _sublane_for(dtype)

    # ~4 MiB per block; double-buffered in+out -> ~16 MiB resident, under the
    # 32 MiB vmem limit set below on every chip generation.
    target_bytes = 4 * 1024 * 1024
    block_rows = max(sublane, (target_bytes // (w * itemsize)) // sublane * sublane)

    if rows <= block_rows:
        # Single block covering the whole array (full-dim rule: any shape legal).
        block_rows = rows
        grid_n = 1
    else:
        grid_n = pl.cdiv(rows, block_rows)
        # v7x shards the parallel axis across 2 TensorCores: prefer an even grid.
        if grid_n % 2 == 1:
            br2 = _round_up(pl.cdiv(rows, grid_n + 1), sublane)
            gn2 = pl.cdiv(rows, br2)
            if gn2 % 2 == 0:
                block_rows, grid_n = br2, gn2

    return pl.pallas_call(
        _activation_chain_kernel,
        out_shape=jax.ShapeDtypeStruct((rows, w), dtype),
        grid_spec=pltpu.PrefetchScalarGridSpec(
            num_scalar_prefetch=0,
            grid=(grid_n,),
            in_specs=[pl.BlockSpec((block_rows, w), lambda i: (i, 0))],
            out_specs=pl.BlockSpec((block_rows, w), lambda i: (i, 0)),
        ),
        compiler_params=pltpu.CompilerParams(
            dimension_semantics=("parallel",),
            vmem_limit_bytes=32 * 1024 * 1024,
        ),
    )(x2d)


def _forward_impl(x):
    """x: float array (any shape, e.g. NCHW). Returns array of same shape/dtype."""
    orig_shape = x.shape
    total = int(x.size)

    # Pick the widest lane-dense W that exactly divides the flat size: no padding,
    # no extra HBM passes (under jit the contiguous reshape is a bitcast).
    w = None
    for cand in (4096, 2048, 1024, 512, 256, 128):
        if total % cand == 0:
            w = cand
            break

    if w is not None:
        out2d = _run_kernel_2d(x.reshape(total // w, w))
        return out2d.reshape(orig_shape)

    # Rare fallback: flat size not a multiple of 128.  Run the kernel on the
    # 128-aligned prefix and handle the (<128-element) tail with plain jnp —
    # avoids full-array pad/slice copies.
    flat = x.reshape(-1)
    main = (total // 128) * 128
    if main == 0:
        return (jnp.clip(flat, 0.0, 3.0) + 3.0).reshape(orig_shape)
    head = _run_kernel_2d(flat[:main].reshape(-1, 128)).reshape(-1)
    tail = jnp.clip(flat[main:], 0.0, 3.0) + 3.0
    return jnp.concatenate([head, tail]).reshape(orig_shape)


model_forward = jax.jit(_forward_impl)


def _reference(x):
    # Unsimplified original chain, used to validate the collapsed kernel.
    v1 = jnp.clip(x, 0.0, 6.0)
    v2 = v1 + 3.0
    v3 = jnp.where(v2 >= 0.0, v2, 0.1 * v2)
    v4 = jnp.clip(v3, 0.0, 6.0)
    return jnp.maximum(v4, 0.0)


if __name__ == "__main__":
    key = jax.random.PRNGKey(0)
    # Same shape as the PyTorch module's example input (1, 3, 64, 64), NCHW.
    x1 = jax.random.normal(key, (1, 3, 64, 64), dtype=jnp.float32)
    out1 = model_forward(x1)
    jax.block_until_ready(out1)
    assert out1.shape == x1.shape and out1.dtype == x1.dtype
    assert jnp.allclose(out1, _reference(x1), atol=1e-6), "mismatch vs reference (small)"

    # Larger input: exercises the multi-block path (grid > 1, parallel axis
    # load-balanced across both TensorCores on v7x).
    x2 = jax.random.normal(jax.random.PRNGKey(1), (4, 16, 128, 128), dtype=jnp.float32)
    out2 = model_forward(x2)
    jax.block_until_ready(out2)
    assert jnp.allclose(out2, _reference(x2), atol=1e-6), "mismatch vs reference (large)"

    print("KERNEL_OK")
</pallas_src>

<mosaic_0001>
module attributes {stable_mosaic.version = 11 : i64} {
  func.func @_activation_chain_kernel(%arg0: i32, %arg1: memref<3x4096xf32, #tpu.memory_space<vmem>>, %arg2: memref<3x4096xf32, #tpu.memory_space<vmem>>) attributes {dimension_semantics = [#tpu.dimension_semantics<parallel>], iteration_bounds = array<i64: 1>, scalar_prefetch = 0 : i64, scratch_operands = 0 : i64, tpu.core_type = #tpu.core_type<tc>, window_params = [{transform_indices = @transform_0, window_bounds = array<i64: 3, 4096>}, {transform_indices = @transform_1, window_bounds = array<i64: 3, 4096>}]} {
    %c0 = arith.constant 0 : index
    %c0_0 = arith.constant 0 : index
    %0 = vector.load %arg1[%c0, %c0_0] : memref<3x4096xf32, #tpu.memory_space<vmem>>, vector<3x4096xf32>
    %cst = arith.constant 0.000000e+00 : f32
    %1 = vector.broadcast %cst : f32 to vector<3x4096xf32>
    %2 = arith.maximumf %0, %1 : vector<3x4096xf32>
    %cst_1 = arith.constant 3.000000e+00 : f32
    %3 = vector.broadcast %cst_1 : f32 to vector<3x4096xf32>
    %4 = arith.minimumf %2, %3 : vector<3x4096xf32>
    %cst_2 = arith.constant 3.000000e+00 : f32
    %5 = vector.broadcast %cst_2 : f32 to vector<3x4096xf32>
    %6 = arith.addf %4, %5 : vector<3x4096xf32>
    %c0_3 = arith.constant 0 : index
    %c0_4 = arith.constant 0 : index
    %7 = vector.load %arg2[%c0_3, %c0_4] : memref<3x4096xf32, #tpu.memory_space<vmem>>, vector<3x4096xf32>
    tpu.vector_store %arg2[%c0_3, %c0_4], %6 {strides = array<i32>} : memref<3x4096xf32, #tpu.memory_space<vmem>>, vector<3x4096xf32>,
    return
  }
  func.func @transform_0(%arg0: i32) -> (i32, i32) {
    %c0_i32 = arith.constant 0 : i32
    %c0_i32_0 = arith.constant 0 : i32
    return %arg0, %c0_i32 : i32, i32
  }
  func.func @transform_1(%arg0: i32) -> (i32, i32) {
    %c0_i32 = arith.constant 0 : i32
    %c0_i32_0 = arith.constant 0 : i32
    return %arg0, %c0_i32 : i32, i32
  }
}

</mosaic_0001>

<llo_original>
// kernel: _forward_impl.1
$region0: #{_forward_impl.1}
  #allocation0 [shape = 'u32[]', space=smem, size = 0x4, offset = 0x4, fixed_abs, tag = 'smem constant byte address 0x4 - core index']
  #allocation1 [shape = 'u32[72,128]{1,0:T(1,128)}', space=vmem, size = 0x9000, scoped, tag = 'internal scratch']
  %s0 = inlined_call_operand.vmem [shape: f32[3,4096], index: 0, kind: input, shape index: {}]
  %s1 = inlined_call_operand.vmem [shape: f32[3,4096], index: 1, kind: output, shape index: {}]
  %s2 = sld [smem:[#allocation0]]
  $region14: #{_forward_impl.1} parent=0
    _
  %s4 = ssub.s32 1, %s2
  %s5 = scalar_select 0, %s4, %s2
  // Predicated region
  $region2: #{_forward_impl.1} parent=0 // pred_check
    _
  $region3: #{_forward_impl.1} parent=0 // pred_check_branch
    %7 = sbr.rel (0) target = $region5
  $region4: #{_forward_impl.1} parent=0 // pred_region
    _
  $region5: #{_forward_impl.1} parent=0 // pred_fallthru
    _
  %v8 = vld [vmem:[%s0] sm:$0x77]
  %v9 = vld [vmem:[%s0 + $0x8] sm:$0x77]
  %v10 = vld [vmem:[%s0 + $0x10] sm:$0x77]
  %v11 = vld [vmem:[%s0 + $0x18] sm:$0x77]
  %v12 = vld [vmem:[%s0 + $0x20] sm:$0x77]
  %v13 = vld [vmem:[%s0 + $0x28] sm:$0x77]
  %v14 = vld [vmem:[%s0 + $0x30] sm:$0x77]
  %v15 = vld [vmem:[%s0 + $0x38] sm:$0x77]
  %v16 = vld [vmem:[%s0 + $0x40] sm:$0x77]
  %v17 = vld [vmem:[%s0 + $0x48] sm:$0x77]
  %v18 = vld [vmem:[%s0 + $0x50] sm:$0x77]
  %v19 = vld [vmem:[%s0 + $0x58] sm:$0x77]
  %v20 = vld [vmem:[%s0 + $0x60] sm:$0x77]
  %v21 = vld [vmem:[%s0 + $0x68] sm:$0x77]
  %v22 = vld [vmem:[%s0 + $0x70] sm:$0x77]
  %v23 = vld [vmem:[%s0 + $0x78] sm:$0x77]
  %v24 = vmax.f32 %v8, 0.0
  %v25 = vmax.f32 %v9, 0.0
  %v26 = vmax.f32 %v10, 0.0
  %v27 = vmax.f32 %v11, 0.0
  %v28 = vmax.f32 %v12, 0.0
  %v29 = vmax.f32 %v13, 0.0
  %v30 = vmax.f32 %v14, 0.0
  %v31 = vmax.f32 %v15, 0.0
  %v32 = vmax.f32 %v16, 0.0
  %v33 = vmax.f32 %v17, 0.0
  %v34 = vmax.f32 %v18, 0.0
  %v35 = vmax.f32 %v19, 0.0
  %v36 = vmax.f32 %v20, 0.0
  %v37 = vmax.f32 %v21, 0.0
  %v38 = vmax.f32 %v22, 0.0
  %v39 = vmax.f32 %v23, 0.0
  %v40 = vmin.f32 %v24, 3.0
  %v41 = vmin.f32 %v25, 3.0
  %v42 = vmin.f32 %v26, 3.0
  %v43 = vmin.f32 %v27, 3.0
  %v44 = vmin.f32 %v28, 3.0
  %v45 = vmin.f32 %v29, 3.0
  %v46 = vmin.f32 %v30, 3.0
  %v47 = vmin.f32 %v31, 3.0
  %v48 = vmin.f32 %v32, 3.0
  %v49 = vmin.f32 %v33, 3.0
  %v50 = vmin.f32 %v34, 3.0
  %v51 = vmin.f32 %v35, 3.0
  %v52 = vmin.f32 %v36, 3.0
  %v53 = vmin.f32 %v37, 3.0
  %v54 = vmin.f32 %v38, 3.0
  %v55 = vmin.f32 %v39, 3.0
  %v56 = vadd.f32 %v40, 3.0
  %v57 = vadd.f32 %v41, 3.0
  %v58 = vadd.f32 %v42, 3.0
  %v59 = vadd.f32 %v43, 3.0
  %v60 = vadd.f32 %v44, 3.0
  %v61 = vadd.f32 %v45, 3.0
  %v62 = vadd.f32 %v46, 3.0
  %v63 = vadd.f32 %v47, 3.0
  %v64 = vadd.f32 %v48, 3.0
  %v65 = vadd.f32 %v49, 3.0
  %v66 = vadd.f32 %v50, 3.0
  %v67 = vadd.f32 %v51, 3.0
  %v68 = vadd.f32 %v52, 3.0
  %v69 = vadd.f32 %v53, 3.0
  %v70 = vadd.f32 %v54, 3.0
  %v71 = vadd.f32 %v55, 3.0
  %72 = vst [vmem:[%s1] sm:$0x77] %v56
  %73 = vst [vmem:[%s1 + $0x8] sm:$0x77] %v57
  %74 = vst [vmem:[%s1 + $0x10] sm:$0x77] %v58
  %75 = vst [vmem:[%s1 + $0x18] sm:$0x77] %v59
  %76 = vst [vmem:[%s1 + $0x20] sm:$0x77] %v60
  %77 = vst [vmem:[%s1 + $0x28] sm:$0x77] %v61
  %78 = vst [vmem:[%s1 + $0x30] sm:$0x77] %v62
  %79 = vst [vmem:[%s1 + $0x38] sm:$0x77] %v63
  %80 = vst [vmem:[%s1 + $0x40] sm:$0x77] %v64
  %81 = vst [vmem:[%s1 + $0x48] sm:$0x77] %v65
  %82 = vst [vmem:[%s1 + $0x50] sm:$0x77] %v66
  %83 = vst [vmem:[%s1 + $0x58] sm:$0x77] %v67
  %84 = vst [vmem:[%s1 + $0x60] sm:$0x77] %v68
  %85 = vst [vmem:[%s1 + $0x68] sm:$0x77] %v69
  %86 = vst [vmem:[%s1 + $0x70] sm:$0x77] %v70
  %87 = vst [vmem:[%s1 + $0x78] sm:$0x77] %v71
  // Predicated region
  $region6: #{_forward_impl.1} parent=0 // pred_check
    _
  $region7: #{_forward_impl.1} parent=0 // pred_check_branch
    %89 = sbr.rel (0) target = $region9
  $region8: #{_forward_impl.1} parent=0 // pred_region
    _
  $region9: #{_forward_impl.1} parent=0 // pred_fallthru
    _
  // Predicated region
  $region10: #{_forward_impl.1} parent=0 // pred_check
    _
  $region11: #{_forward_impl.1} parent=0 // pred_check_branch
    %91 = sbr.rel (0) target = $region13
  $region12: #{_forward_impl.1} parent=0 // pred_region
    _
  $region13: #{_forward_impl.1} parent=0 // pred_fallthru
    _

</llo_original>
